<compile_context>
chip_gen: v5e
topology: v5e:2x2
jax: 0.10.0
libtpu: 0.0.40
codegen_flags: <defaults>
</compile_context>

<pallas_src>
import functools

import jax
import jax.numpy as jnp
import numpy as np
from jax.experimental import pallas as pl
from jax.experimental.pallas import tpu as pltpu


def _pow_maybe_int(base, gamma):
    """base**gamma with small integer gamma specialized to plain multiplies."""
    g = float(gamma)
    if g == 0.0:
        return jnp.ones_like(base)
    if g == float(int(g)) and 1 <= int(g) <= 8:
        out = base
        for _ in range(int(g) - 1):
            out = out * base
        return out
    return jnp.power(base, jnp.float32(g))


def _focal_loss_kernel(x_ref, t_ref, o_ref, *,
                       alpha, gamma, eps, smoothing, confidence,
                       num_classes, s_total, tile_rows, need_mask):
    si = pl.program_id(1)

    x = x_ref[...].astype(jnp.float32)        # (C, R, 128) logits
    t = t_ref[...]                            # (R, 128) int32 class ids

    # Softmax over the class axis (leading dim -> elementwise across C slabs).
    m = jnp.max(x, axis=0)                                    # (R, 128)
    e = jnp.exp(x - m[jnp.newaxis])                           # (C, R, 128)  EUP
    denom = jnp.sum(e, axis=0)                                # (R, 128)
    inv_denom = pl.reciprocal(denom, approx=False)            # exact: stays in ref tol

    cls = jax.lax.broadcasted_iota(jnp.int32, x.shape, 0)     # class id per slab
    t_b = t[jnp.newaxis]                                      # (1, R, 128)

    if smoothing == 0.0:
        # Only the target class contributes -> log/pow on (R, 128) only.
        e_t = jnp.sum(jnp.where(cls == t_b, e, 0.0), axis=0)  # (R, 128)
        p_t = e_t * inv_denom + eps
        w = _pow_maybe_int(1.0 - p_t, gamma)
        loss = (-alpha * confidence) * w * jnp.log(p_t)       # (R, 128)
    else:
        # TODO(synk): a log-sum-exp form ((x - m) - log(denom)) would cut the EUP
        # log count from C*T to T but moves where eps enters the log; kept the
        # eps-exact form to match the reference within tight tolerances.
        p = e * inv_denom[jnp.newaxis] + eps                  # (C, R, 128)
        off_value = smoothing / (num_classes - 1)
        one_hot = jnp.where(cls == t_b, jnp.float32(confidence),
                            jnp.float32(off_value))
        w = _pow_maybe_int(1.0 - p, gamma)
        focal = (-alpha) * w * jnp.log(p)
        loss = jnp.sum(one_hot * focal, axis=0)               # (R, 128)

    def _fold(v):
        # (R, 128) -> (1, 128): VPU adds across 8-row groups + one sublane reduce.
        r = v.shape[0]
        if r % 8 == 0 and r > 8:
            v = v.reshape(r // 8, 8, 128).sum(axis=0)         # tile-aligned free view
        return jnp.sum(v, axis=0, keepdims=True)

    if need_mask:
        last = pl.num_programs(1) - 1

        @pl.when(si != last)
        def _store_full():
            o_ref[...] = _fold(loss)

        @pl.when(si == last)
        def _store_masked():
            # Zero padded / grid-boundary positions before reducing (also kills
            # any NaN/Inf produced from unspecified boundary-block contents).
            row = jax.lax.broadcasted_iota(jnp.int32, loss.shape, 0)
            lane = jax.lax.broadcasted_iota(jnp.int32, loss.shape, 1)
            flat = (si * tile_rows + row) * 128 + lane
            o_ref[...] = _fold(jnp.where(flat < s_total, loss, 0.0))
    else:
        o_ref[...] = _fold(loss)


def focal_loss_pallas(logits_nchw, target_nhw, *,
                      alpha=0.25, gamma=2.0, reduction="mean",
                      eps=1e-8, smoothing=0.0,
                      tile_rows=None, tile_bytes=4 * 1024 * 1024):
    if reduction not in ("mean", "sum"):
        # TODO(synk): reduction='none' (per-position loss output) not implemented.
        raise NotImplementedError("only reduction in ('mean', 'sum') is implemented")
    confidence = 1.0 - smoothing

    b, c, h, w = logits_nchw.shape
    assert target_nhw.shape == (b, h, w)
    s = h * w
    n_rows = (s + 127) // 128
    s_pad = n_rows * 128

    # Free reshapes when s % 128 == 0; otherwise a single small pad to a lane multiple.
    x = logits_nchw.reshape(b, c, s)
    t = target_nhw.reshape(b, 1, s).astype(jnp.int32)
    if s_pad != s:
        x = jnp.pad(x, ((0, 0), (0, 0), (0, s_pad - s)))
        t = jnp.pad(t, ((0, 0), (0, 0), (0, s_pad - s)))
    x = x.reshape(b, c, n_rows, 128)
    t = t.reshape(b, 1, n_rows, 128)

    itemsize = int(jnp.dtype(x.dtype).itemsize)
    if tile_rows is None:
        tr = max(8, tile_bytes // (c * itemsize * 128))
    else:
        tr = max(1, int(tile_rows))
    if tr >= n_rows:
        tr = n_rows                      # full extent is always a legal block dim
    else:
        tr = max(8, (tr // 8) * 8)       # tiled blocks need sublane-aligned rows
        tr = min(tr, n_rows)
    n_s = (n_rows + tr - 1) // tr
    need_mask = (n_s * tr * 128) != s

    # Real double-buffered VMEM footprint: logits + int32 target + (1,128) partial.
    block_bytes = tr * 128 * (c * itemsize + 4) + 128 * 4
    vmem_limit = int(min(max(2 * block_bytes + (8 << 20), 16 << 20), 56 << 20))

    total_positions = b * s
    out_scale = (1.0 / total_positions) if reduction == "mean" else 1.0

    kernel = functools.partial(
        _focal_loss_kernel,
        alpha=float(alpha), gamma=float(gamma), eps=float(eps),
        smoothing=float(smoothing), confidence=float(confidence),
        num_classes=c, s_total=s, tile_rows=tr, need_mask=need_mask,
    )

    n_elem = b * c * s
    transcendentals = n_elem + total_positions + (
        2 * total_positions if smoothing == 0.0 else 2 * n_elem)
    cost = pl.CostEstimate(
        flops=int(10 * n_elem + 12 * total_positions),
        transcendentals=int(transcendentals),
        bytes_accessed=int(x.size * itemsize + t.size * 4 + b * n_s * 128 * 4),
    )

    partials = pl.pallas_call(
        kernel,
        out_shape=jax.ShapeDtypeStruct((b, n_s, 1, 128), jnp.float32),
        grid=(b, n_s),
        in_specs=[
            pl.BlockSpec((None, c, tr, 128), lambda bi, si: (bi, 0, si, 0)),
            pl.BlockSpec((None, None, tr, 128), lambda bi, si: (bi, 0, si, 0)),
        ],
        out_specs=pl.BlockSpec((None, None, 1, 128), lambda bi, si: (bi, si, 0, 0)),
        compiler_params=pltpu.CompilerParams(
            # Each grid step writes its own partial block -> no cross-step state,
            # both axes parallel (uses both TensorCores on v7x).
            dimension_semantics=("parallel", "parallel"),
            vmem_limit_bytes=vmem_limit,
        ),
        cost_estimate=cost,
    )(x, t)

    # Tiny final reduction + mean/sum scaling in plain JAX.
    return jnp.sum(partials) * jnp.float32(out_scale)


def focal_loss_reference(logits_nchw, target_nhw, *,
                         alpha=0.25, gamma=2.0, eps=1e-8, smoothing=0.0):
    confidence = 1.0 - smoothing
    c = logits_nchw.shape[1]
    p = jax.nn.softmax(logits_nchw, axis=1) + eps
    oh = jax.nn.one_hot(target_nhw, c, axis=1, dtype=logits_nchw.dtype)
    one_hot = jnp.full_like(logits_nchw, smoothing / (c - 1)) * (1.0 - oh) + confidence * oh
    weight = jnp.power(1.0 - p, gamma)
    focal = -alpha * weight * jnp.log(p)
    loss_tmp = jnp.sum(one_hot * focal, axis=1)
    return jnp.mean(loss_tmp)


if __name__ == "__main__":
    key = jax.random.PRNGKey(0)
    k1, k2, k3, k4, k5, k6 = jax.random.split(key, 6)

    # Case 1: default config (gamma=2, smoothing=0) -> specialized fast path.
    B, C, H, W = 2, 4, 16, 16
    logits = jax.random.normal(k1, (B, C, H, W), dtype=jnp.float32)
    target = jax.random.randint(k2, (B, H, W), 0, C, dtype=jnp.int32)

    loss = jax.block_until_ready(
        focal_loss_pallas(logits, target, alpha=0.25, gamma=2.0,
                          reduction="mean", eps=1e-8, smoothing=0.0))
    ref = jax.block_until_ready(
        focal_loss_reference(logits, target, alpha=0.25, gamma=2.0,
                             eps=1e-8, smoothing=0.0))
    if not np.allclose(np.asarray(loss), np.asarray(ref), rtol=1e-5, atol=1e-6):
        raise AssertionError(f"case1 mismatch: pallas={loss} ref={ref}")

    # Case 2: label smoothing + non-integer gamma -> general (all-class) path.
    loss2 = jax.block_until_ready(
        focal_loss_pallas(logits, target, alpha=0.5, gamma=1.5,
                          reduction="mean", eps=1e-8, smoothing=0.1))
    ref2 = jax.block_until_ready(
        focal_loss_reference(logits, target, alpha=0.5, gamma=1.5,
                             eps=1e-8, smoothing=0.1))
    if not np.allclose(np.asarray(loss2), np.asarray(ref2), rtol=1e-5, atol=1e-6):
        raise AssertionError(f"case2 mismatch: pallas={loss2} ref={ref2}")

    # Case 3: spatial extent not a multiple of 128 -> padded + masked last tile.
    B3, C3, H3, W3 = 2, 4, 18, 18
    logits3 = jax.random.normal(k3, (B3, C3, H3, W3), dtype=jnp.float32)
    target3 = jax.random.randint(k4, (B3, H3, W3), 0, C3, dtype=jnp.int32)
    loss3 = jax.block_until_ready(
        focal_loss_pallas(logits3, target3, alpha=0.25, gamma=2.0,
                          reduction="mean", eps=1e-8, smoothing=0.0))
    ref3 = jax.block_until_ready(
        focal_loss_reference(logits3, target3, alpha=0.25, gamma=2.0,
                             eps=1e-8, smoothing=0.0))
    if not np.allclose(np.asarray(loss3), np.asarray(ref3), rtol=1e-5, atol=1e-6):
        raise AssertionError(f"case3 mismatch: pallas={loss3} ref={ref3}")

    # Case 4: multi-tile grid with a partial (boundary) last spatial tile.
    B4, C4, H4, W4 = 2, 4, 40, 40
    logits4 = jax.random.normal(k5, (B4, C4, H4, W4), dtype=jnp.float32)
    target4 = jax.random.randint(k6, (B4, H4, W4), 0, C4, dtype=jnp.int32)
    loss4 = jax.block_until_ready(
        focal_loss_pallas(logits4, target4, alpha=0.25, gamma=2.0,
                          reduction="mean", eps=1e-8, smoothing=0.0,
                          tile_rows=8))
    ref4 = jax.block_until_ready(
        focal_loss_reference(logits4, target4, alpha=0.25, gamma=2.0,
                             eps=1e-8, smoothing=0.0))
    if not np.allclose(np.asarray(loss4), np.asarray(ref4), rtol=1e-5, atol=1e-6):
        raise AssertionError(f"case4 mismatch: pallas={loss4} ref={ref4}")

    print("KERNEL_OK")
</pallas_src>

<mosaic_0001>
module attributes {stable_mosaic.version = 11 : i64} {
  func.func @_focal_loss_kernel(%arg0: i32, %arg1: i32, %arg2: memref<1x4x2x128xf32, #tpu.memory_space<vmem>>, %arg3: memref<1x1x2x128xi32, #tpu.memory_space<vmem>>, %arg4: memref<1x1x1x128xf32, #tpu.memory_space<vmem>>) attributes {dimension_semantics = [#tpu.dimension_semantics<parallel>, #tpu.dimension_semantics<parallel>], iteration_bounds = array<i64: 2, 1>, scalar_prefetch = 0 : i64, scratch_operands = 0 : i64, tpu.core_type = #tpu.core_type<tc>, window_params = [{transform_indices = @transform_0, window_bounds = array<i64: 1, 4, 2, 128>}, {transform_indices = @transform_1, window_bounds = array<i64: 1, 1, 2, 128>}, {transform_indices = @transform_2, window_bounds = array<i64: 1, 1, 1, 128>}]} {
    %c0 = arith.constant 0 : index
    %c0_0 = arith.constant 0 : index
    %c0_1 = arith.constant 0 : index
    %c0_2 = arith.constant 0 : index
    %0 = vector.load %arg2[%c0, %c0_0, %c0_1, %c0_2] : memref<1x4x2x128xf32, #tpu.memory_space<vmem>>, vector<1x4x2x128xf32>
    %1 = vector.shape_cast %0 : vector<1x4x2x128xf32> to vector<4x2x128xf32>
    %c0_3 = arith.constant 0 : index
    %c0_4 = arith.constant 0 : index
    %c0_5 = arith.constant 0 : index
    %c0_6 = arith.constant 0 : index
    %2 = vector.load %arg3[%c0_3, %c0_4, %c0_5, %c0_6] : memref<1x1x2x128xi32, #tpu.memory_space<vmem>>, vector<1x1x2x128xi32>
    %3 = vector.shape_cast %2 : vector<1x1x2x128xi32> to vector<2x128xi32>
    %cst = arith.constant dense<0xFF800000> : vector<2x128xf32>
    %4 = vector.multi_reduction <maximumf>, %1, %cst [0] : vector<4x2x128xf32> to vector<2x128xf32>
    %5 = vector.shape_cast %4 : vector<2x128xf32> to vector<1x2x128xf32>
    %6 = vector.broadcast %5 : vector<1x2x128xf32> to vector<4x2x128xf32>
    %7 = arith.subf %1, %6 : vector<4x2x128xf32>
    %8 = math.exp %7 : vector<4x2x128xf32>
    %cst_7 = arith.constant dense<0.000000e+00> : vector<2x128xf32>
    %9 = vector.multi_reduction <add>, %8, %cst_7 [0] : vector<4x2x128xf32> to vector<2x128xf32>
    %10 = tpu.reciprocal %9 : vector<2x128xf32> -> vector<2x128xf32>
    %11 = tpu.iota {dimensions = array<i32: 0>} : vector<4x2x128xi32>
    %12 = vector.shape_cast %3 : vector<2x128xi32> to vector<1x2x128xi32>
    %13 = vector.broadcast %12 : vector<1x2x128xi32> to vector<4x2x128xi32>
    %14 = arith.cmpi eq, %11, %13 : vector<4x2x128xi32>
    %cst_8 = arith.constant 0.000000e+00 : f32
    %15 = vector.broadcast %cst_8 : f32 to vector<4x2x128xf32>
    %16 = arith.select %14, %8, %15 : vector<4x2x128xi1>, vector<4x2x128xf32>
    %cst_9 = arith.constant dense<0.000000e+00> : vector<2x128xf32>
    %17 = vector.multi_reduction <add>, %16, %cst_9 [0] : vector<4x2x128xf32> to vector<2x128xf32>
    %18 = arith.mulf %17, %10 : vector<2x128xf32>
    %cst_10 = arith.constant 9.99999993E-9 : f32
    %19 = vector.broadcast %cst_10 : f32 to vector<2x128xf32>
    %20 = arith.addf %18, %19 : vector<2x128xf32>
    %cst_11 = arith.constant 1.000000e+00 : f32
    %21 = vector.broadcast %cst_11 : f32 to vector<2x128xf32>
    %22 = arith.subf %21, %20 : vector<2x128xf32>
    %23 = arith.mulf %22, %22 : vector<2x128xf32>
    %cst_12 = arith.constant -2.500000e-01 : f32
    %24 = vector.broadcast %cst_12 : f32 to vector<2x128xf32>
    %25 = arith.mulf %24, %23 : vector<2x128xf32>
    %26 = math.log %20 : vector<2x128xf32>
    %27 = arith.mulf %25, %26 : vector<2x128xf32>
    %cst_13 = arith.constant dense<0.000000e+00> : vector<128xf32>
    %28 = vector.multi_reduction <add>, %27, %cst_13 [0] : vector<2x128xf32> to vector<128xf32>
    %29 = vector.shape_cast %28 : vector<128xf32> to vector<1x128xf32>
    %c0_14 = arith.constant 0 : index
    %c0_15 = arith.constant 0 : index
    %c0_16 = arith.constant 0 : index
    %c0_17 = arith.constant 0 : index
    %30 = vector.load %arg4[%c0_14, %c0_15, %c0_16, %c0_17] : memref<1x1x1x128xf32, #tpu.memory_space<vmem>>, vector<1x1x1x128xf32>
    %31 = vector.shape_cast %30 : vector<1x1x1x128xf32> to vector<1x128xf32>
    %32 = vector.shape_cast %29 : vector<1x128xf32> to vector<1x1x1x128xf32>
    tpu.vector_store %arg4[%c0_14, %c0_15, %c0_16, %c0_17], %32 {strides = array<i32>} : memref<1x1x1x128xf32, #tpu.memory_space<vmem>>, vector<1x1x1x128xf32>,
    return
  }
  func.func @transform_0(%arg0: i32, %arg1: i32) -> (i32, i32, i32, i32) {
    %c0_i32 = arith.constant 0 : i32
    %c0_i32_0 = arith.constant 0 : i32
    %c0_i32_1 = arith.constant 0 : i32
    return %arg0, %c0_i32, %arg1, %c0_i32_0 : i32, i32, i32, i32
  }
  func.func @transform_1(%arg0: i32, %arg1: i32) -> (i32, i32, i32, i32) {
    %c0_i32 = arith.constant 0 : i32
    %c0_i32_0 = arith.constant 0 : i32
    %c0_i32_1 = arith.constant 0 : i32
    return %arg0, %c0_i32, %arg1, %c0_i32_0 : i32, i32, i32, i32
  }
  func.func @transform_2(%arg0: i32, %arg1: i32) -> (i32, i32, i32, i32) {
    %c0_i32 = arith.constant 0 : i32
    %c0_i32_0 = arith.constant 0 : i32
    %c0_i32_1 = arith.constant 0 : i32
    return %arg0, %arg1, %c0_i32, %c0_i32_0 : i32, i32, i32, i32
  }
}

</mosaic_0001>

<llo_original>
// kernel: tpu_custom_call.1
$region0: #{tpu_custom_call.1}
  #allocation0 [shape = 'u32[]', space=smem, size = 0x4, offset = 0x4, fixed_abs, tag = 'smem constant byte address 0x4 - core index']
  #allocation1 [shape = 'u32[72,128]{1,0:T(1,128)}', space=vmem, size = 0x9000, scoped, tag = 'internal scratch']
  %s0 = inlined_call_operand.hbm [shape: f32[2,4,2,128], index: 0, kind: input, shape index: {}]
  %s1 = inlined_call_operand.hbm [shape: s32[2,1,2,128], index: 1, kind: input, shape index: {}]
  %s2 = inlined_call_operand.hbm [shape: f32[2,1,1,128], index: 2, kind: output, shape index: {}]
  %s3 = sld [smem:[#allocation0]]
  $region49: #{tpu_custom_call.1} parent=0
    _
  %s5 = ssub.s32 1, %s3
  %s6 = scalar_select 0, %s5, %s3
  $region1: #{tpu_custom_call.1} parent=0
    #allocation2 [shape = 'u8[8192]{0}', space=vmem, size = 0x2000, scoped, tag = 'input window, operand 0']
    #allocation3 [shape = 's32[2]{0}', space=sflag, size = 0x8, scoped, tag = 'scoped memory for tpu_custom_call.1']
    #allocation4 [shape = 's32[2]{0}', space=sflag, size = 0x8, scoped, tag = 'scoped memory for tpu_custom_call.1']
    #allocation5 [shape = 'u8[2048]{0}', space=vmem, size = 0x800, scoped, tag = 'input window, operand 1']
    #allocation6 [shape = 's32[2]{0}', space=sflag, size = 0x8, scoped, tag = 'scoped memory for tpu_custom_call.1']
    #allocation7 [shape = 'u8[1024]{0}', space=vmem, size = 0x400, scoped, tag = 'output window, operand 0']
    %7 = vsyncpa [#allocation3], 0
    %s8 = scalar_lea.sflag [#allocation3], 1
    %9 = vsyncpa %s8, 0
    %10 = vsyncpa [#allocation6], 0
    %s11 = scalar_lea.sflag [#allocation6], 1
    %12 = vsyncpa %s11, 0
    %13 = vsyncpa [#allocation4], 0
    %s14 = scalar_lea.sflag [#allocation4], 1
    %15 = vsyncpa %s14, 0
    loop: start=0, step=1, limit=4
    $region2: #{tpu_custom_call.1} parent=1 // loop_pre_header
      _
    $region3: #{tpu_custom_call.1} parent=1 // loop_header
      %s17 = sphi 0, %s21
      %p18 = scmp.ge.s32.totalorder %s17, 4
      %s24 = sphi 0, %s36
      %s25 = sphi 0, %s32
      %s26 = sphi 0, %s24
      %s27 = sphi 0, %s25
      %s28 = sphi 0, %s26
      %s29 = sphi 0, %s27
      %s41 = sphi 0, %s43
      %s44 = sphi 0, %s41
      %s45 = sphi 0, %s44
      %s61 = sphi 0, %s45
      %s69 = sphi 0, %s71
      %s72 = sphi 0, %s69
      %s73 = sphi 0, %s72
      %s89 = sphi 0, %s73
      %s97 = sphi 0, %s99
      %s100 = sphi 0, %s97
      %s101 = sphi 0, %s100
      %s117 = sphi 0, %s101
    $region4: #{tpu_custom_call.1} parent=1 // loop_header_branch
      %20 = sbr.rel (%p18) target = $region8
    $region5: #{tpu_custom_call.1} parent=1 // loop_body
      %s22 = ssub.s32 %s17, 1
      %s23 = ssub.s32 %s17, 2
      %s30 = sadd.s32 1, %s25
      %p31 = scmp.ge.s32.totalorder %s30, 1
      %s32 = scalar_select %p31, 0, %s30
      %s33 = sadd.s32 1, %s24
      %s34 = scalar_select %p31, %s33, %s24
      %p35 = scmp.ge.s32.totalorder %s34, 2
      %s36 = scalar_select %p35, 0, %s34
      %s37 = ssub.s32 %s24, %s36
      %s38 = ssub.s32 %s25, %s32
      %s39 = sor.u32 %s37, %s38
      %p40 = scmp.eq.s32.totalorder %s39, 0
      %s42 = sadd.s32 %s41, 1
      %s43 = scalar_select %p40, %s41, %s42
      %p46 = pneg %p40
      %p47 = scmp.eq.s32.totalorder %s17, 1
      %p48 = por %p46, %p47
      %p49 = scmp.ne.s32.totalorder %s41, %s44
      %p50 = scmp.eq.s32.totalorder %s17, 0
      %p51 = por %p49, %p50
      %p52 = scmp.ne.s32.totalorder %s41, %s44
      %p53 = scmp.eq.s32.totalorder %s22, 1
      %p54 = por %p52, %p53
      %p55 = scmp.ne.s32.totalorder %s44, %s45
      %p56 = scmp.eq.s32.totalorder %s22, 0
      %p57 = por %p55, %p56
      %p58 = scmp.ne.s32.totalorder %s44, %s45
      %p59 = scmp.eq.s32.totalorder %s23, 1
      %p60 = por %p58, %p59
      %p62 = scmp.ne.s32.totalorder %s45, %s61
      %p63 = scmp.eq.s32.totalorder %s23, 0
      %p64 = por %p62, %p63
      %s65 = ssub.s32 %s24, %s36
      %s66 = ssub.s32 %s25, %s32
      %s67 = sor.u32 %s65, %s66
      %p68 = scmp.eq.s32.totalorder %s67, 0
      %s70 = sadd.s32 %s69, 1
      %s71 = scalar_select %p68, %s69, %s70
      %p74 = pneg %p68
      %p75 = scmp.eq.s32.totalorder %s17, 1
      %p76 = por %p74, %p75
      %p77 = scmp.ne.s32.totalorder %s69, %s72
      %p78 = scmp.eq.s32.totalorder %s17, 0
      %p79 = por %p77, %p78
      %p80 = scmp.ne.s32.totalorder %s69, %s72
      %p81 = scmp.eq.s32.totalorder %s22, 1
      %p82 = por %p80, %p81
      %p83 = scmp.ne.s32.totalorder %s72, %s73
      %p84 = scmp.eq.s32.totalorder %s22, 0
      %p85 = por %p83, %p84
      %p86 = scmp.ne.s32.totalorder %s72, %s73
      %p87 = scmp.eq.s32.totalorder %s23, 1
      %p88 = por %p86, %p87
      %p90 = scmp.ne.s32.totalorder %s73, %s89
      %p91 = scmp.eq.s32.totalorder %s23, 0
      %p92 = por %p90, %p91
      %s93 = ssub.s32 %s24, %s36
      %s94 = ssub.s32 %s25, %s32
      %s95 = sor.u32 %s93, %s94
      %p96 = scmp.eq.s32.totalorder %s95, 0
      %s98 = sadd.s32 %s97, 1
      %s99 = scalar_select %p96, %s97, %s98
      %p102 = pneg %p96
      %p103 = scmp.eq.s32.totalorder %s17, 1
      %p104 = por %p102, %p103
      %p105 = scmp.ne.s32.totalorder %s97, %s100
      %p106 = scmp.eq.s32.totalorder %s17, 0
      %p107 = por %p105, %p106
      %p108 = scmp.ne.s32.totalorder %s97, %s100
      %p109 = scmp.eq.s32.totalorder %s22, 1
      %p110 = por %p108, %p109
      %p111 = scmp.ne.s32.totalorder %s100, %s101
      %p112 = scmp.eq.s32.totalorder %s22, 0
      %p113 = por %p111, %p112
      %p114 = scmp.ne.s32.totalorder %s100, %s101
      %p115 = scmp.eq.s32.totalorder %s23, 1
      %p116 = por %p114, %p115
      %p118 = scmp.ne.s32.totalorder %s101, %s117
      %p119 = scmp.eq.s32.totalorder %s23, 0
      %p120 = por %p118, %p119
      %p121 = scmp.le.s32.totalorder 1, %s17
      %p122 = scmp.lt.s32.totalorder %s17, 3
      %p123 = pnand %p121, %p122
      %p124 = pneg %p123
      // Predicated region
      $region9: #{tpu_custom_call.1} parent=5 // pred_check
        _
      $region10: #{tpu_custom_call.1} parent=5 // pred_check_branch
        %126 = sbr.rel (%p123) target = $region12
      $region11: #{tpu_custom_call.1} parent=5 // pred_region
        %s127 = ssub.s32 %s17, 1
      $region12: #{tpu_custom_call.1} parent=5 // pred_fallthru
        _
      %p128 = scmp.lt.s32.totalorder %s17, 2
      // Predicated region
      $region13: #{tpu_custom_call.1} parent=5 // pred_check
        %p129 = pneg %p128
      $region14: #{tpu_custom_call.1} parent=5 // pred_check_branch
        %131 = sbr.rel (%p129) target = $region16
      $region15: #{tpu_custom_call.1} parent=5 // pred_region
        // Predicated region
        $region17: #{tpu_custom_call.1} parent=15 // pred_check
          %p132 = pneg %p51
        $region18: #{tpu_custom_call.1} parent=15 // pred_check_branch
          %134 = sbr.rel (%p132) target = $region20
        $region19: #{tpu_custom_call.1} parent=15 // pred_region
          %s135 = sand.u32 %s41, 1
          %s136 = scalar_lea.sflag [#allocation3], %s135
          %s137 = sand.u32 %s41, 1
          %s138 = smul.addr %s137, 8
          %s139 = scalar_lea.vmem [#allocation2], %s138
          %141 = vsyncadd %s136, 0
          %s142 = smul.addr %s24, 4
          %s143 = sadd.s32 %s25, %s142
          %s144 = smul.addr %s143, 2
          %s145 = scalar_lea.hbm %s0, %s144
          %s146 = sshll.u32 %s145, 4
          %s147 = int_to_ptr.hbm [resolvable:$true] %s146
          %s148 = sshll.u32 %s139, 4
          %s149 = int_to_ptr.vmem [resolvable:$true] %s148
          %154 = dma.hbm_to_vmem [thread:$0]  %s147, 128, %s149, %s136, 32, 32, 2
        $region20: #{tpu_custom_call.1} parent=15 // pred_fallthru
          _
        // Predicated region
        $region21: #{tpu_custom_call.1} parent=15 // pred_check
          %p155 = pneg %p79
        $region22: #{tpu_custom_call.1} parent=15 // pred_check_branch
          %157 = sbr.rel (%p155) target = $region24
        $region23: #{tpu_custom_call.1} parent=15 // pred_region
          %s158 = sand.u32 %s69, 1
          %s159 = scalar_lea.sflag [#allocation6], %s158
          %s160 = sand.u32 %s69, 1
          %s161 = smul.addr %s160, 2
          %s162 = scalar_lea.vmem [#allocation5], %s161
          %164 = vsyncadd %s159, 0
          %s165 = sadd.s32 %s25, %s24
          %s166 = smul.addr %s165, 2
          %s167 = scalar_lea.hbm %s1, %s166
          %s169 = sshll.u32 %s167, 4
          %s170 = int_to_ptr.hbm [resolvable:$true] %s169
          %s171 = sshll.u32 %s162, 4
          %s172 = int_to_ptr.vmem [resolvable:$true] %s171
          %174 = dma.hbm_to_vmem [thread:$0]  %s170, 32, %s172, %s159
        $region24: #{tpu_custom_call.1} parent=15 // pred_fallthru
          _
      $region16: #{tpu_custom_call.1} parent=5 // pred_fallthru
        _
      %p175 = scmp.le.s32.totalorder 1, %s17
      %p176 = scmp.lt.s32.totalorder %s17, 3
      %p177 = pnand %p175, %p176
      %p178 = pneg %p177
      // Predicated region
      $region25: #{tpu_custom_call.1} parent=5 // pred_check
        _
      $region26: #{tpu_custom_call.1} parent=5 // pred_check_branch
        %180 = sbr.rel (%p177) target = $region28
      $region27: #{tpu_custom_call.1} parent=5 // pred_region
        %s181 = ssub.s32 %s17, 1
        %s182 = sand.u32 %s44, 1
        %s183 = scalar_lea.sflag [#allocation3], %s182
        %s184 = sand.u32 %s44, 1
        %s185 = smul.addr %s184, 8
        %s186 = scalar_lea.vmem [#allocation2], %s185
        // Predicated region
        $region29: #{tpu_custom_call.1} parent=27 // pred_check
          %p187 = pneg %p57
        $region30: #{tpu_custom_call.1} parent=27 // pred_check_branch
          %189 = sbr.rel (%p187) target = $region32
        $region31: #{tpu_custom_call.1} parent=27 // pred_region
          %191 = dma.done %s183, 128
        $region32: #{tpu_custom_call.1} parent=27 // pred_fallthru
          _
        %s192 = sand.u32 %s72, 1
        %s193 = scalar_lea.sflag [#allocation6], %s192
        %s194 = sand.u32 %s72, 1
        %s195 = smul.addr %s194, 2
        %s196 = scalar_lea.vmem [#allocation5], %s195
        // Predicated region
        $region33: #{tpu_custom_call.1} parent=27 // pred_check
          %p197 = pneg %p85
        $region34: #{tpu_custom_call.1} parent=27 // pred_check_branch
          %199 = sbr.rel (%p197) target = $region36
        $region35: #{tpu_custom_call.1} parent=27 // pred_region
          %201 = dma.done %s193, 32
        $region36: #{tpu_custom_call.1} parent=27 // pred_fallthru
          _
        %s202 = sand.u32 %s44, 1
        %s203 = scalar_lea.sflag [#allocation3], %s202
        %s204 = sand.u32 %s44, 1
        %s205 = smul.addr %s204, 8
        %s206 = scalar_lea.vmem [#allocation2], %s205
        %p207 = pneg %p57
        %p208 = pneg %p54
        %s209 = sand.u32 %s72, 1
        %s210 = scalar_lea.sflag [#allocation6], %s209
        %s211 = sand.u32 %s72, 1
        %s212 = smul.addr %s211, 2
        %s213 = scalar_lea.vmem [#allocation5], %s212
        %p214 = pneg %p85
        %p215 = pneg %p82
        %p216 = pneg %p113
        %p217 = pneg %p110
        %s218 = sand.u32 %s100, 1
        %s219 = scalar_lea.sflag [#allocation4], %s218
        %s220 = sand.u32 %s100, 1
        %s221 = scalar_lea.vmem [#allocation7], %s220
        %v222 = vld [vmem:[%s186] sm:$0x3]
        %v223 = vld [vmem:[%s186 + $0x2] sm:$0x3]
        %v224 = vld [vmem:[%s186 + $0x4] sm:$0x3]
        %v225 = vld [vmem:[%s186 + $0x6] sm:$0x3]
        %v226 = vld [vmem:[%s196] sm:$0x3]
        %vm227 = vcmask 1041408
        %v228 = vsel %vm227, %v222, -inf
        %v229 = vsel %vm227, %v223, -inf
        %v230 = vsel %vm227, %v224, -inf
        %v231 = vsel %vm227, %v225, -inf
        %v232 = vmax.f32 %v228, %v229
        %v233 = vmax.f32 %v230, %v231
        %v234 = vmax.f32 %v232, %v233
        %v235 = vsub.f32 %v222, %v234
        %v236 = vsub.f32 %v223, %v234
        %v237 = vsub.f32 %v224, %v234
        %v238 = vsub.f32 %v225, %v234
        %v239 = vmul.f32 %v235, 1.442695
        %v240 = vpow.pop %v239
        %v241 = vmul.f32 %v236, 1.442695
        %v242 = vpow.pop %v241
        %v243 = vmul.f32 %v237, 1.442695
        %v244 = vpow.pop %v243
        %v245 = vmul.f32 %v238, 1.442695
        %v246 = vpow.pop %v245
        %v247 = vsel %vm227, %v240, 0.0
        %v248 = vsel %vm227, %v242, 0.0
        %v249 = vadd.f32 %v247, %v248
        %v250 = vsel %vm227, %v244, 0.0
        %v251 = vadd.f32 %v249, %v250
        %v252 = vsel %vm227, %v246, 0.0
        %v253 = vadd.f32 %v251, %v252
        %v254 = vrcp.pop %v253
        %v255 = vmul.f32 %v253, %v254
        %v256 = vsub.f32 1.0, %v255
        %v257 = vmul.f32 %v254, %v256
        %v258 = vadd.f32 %v254, %v257
        %vm259 = vweird.f32 %v253
        %vm260 = vweird.f32 %v254
        %vm261 = vmor %vm259, %vm260
        %v262 = vsel %vm261, %v254, %v258
        %v263 = vand.u32 2147483647, %v253
        %vm264 = vcmp.eq.f32.partialorder %v263, 8.507059e+37
        %v265 = vand.u32 %v253, 2147483648
        %v266 = vor.u32 1.1754944e-38, %v265
        %v267 = vsel %vm264, %v266, %v262
        %vm268 = vcmp.eq.s32.totalorder %v226, 0
        %vm269 = vcmp.eq.s32.totalorder %v226, 1
        %vm270 = vcmp.eq.s32.totalorder %v226, 2
        %vm271 = vcmp.eq.s32.totalorder %v226, 3
        %v272 = vsel %vm268, %v240, 0.0
        %v273 = vsel %vm269, %v242, 0.0
        %v274 = vsel %vm270, %v244, 0.0
        %v275 = vsel %vm271, %v246, 0.0
        %v276 = vsel %vm227, %v272, 0.0
        %v277 = vsel %vm227, %v273, 0.0
        %v278 = vadd.f32 %v276, %v277
        %v279 = vsel %vm227, %v274, 0.0
        %v280 = vadd.f32 %v278, %v279
        %v281 = vsel %vm227, %v275, 0.0
        %v282 = vadd.f32 %v280, %v281
        %v283 = vmul.f32 %v282, %v267
        %v284 = vadd.f32 %v283, 1e-08
        %v285 = vsub.f32 1.0, %v284
        %v286 = vmul.f32 %v285, %v285
        %v287 = vmul.f32 %v286, -0.25
        %v288 = vlog2.pop %v284
        %v289 = vmul.f32 %v288, 0.6931472
        %v290 = vmul.f32 %v287, %v289
        %v291 = vsel %vm227, %v290, 0.0
        %v292 = vrot.slane %v291, 4
        %v293 = vadd.f32 %v291, %v292
        %v294 = vrot.slane %v293, 2
        %v295 = vadd.f32 %v293, %v294
        %v296 = vrot.slane %v295, 1
        %v297 = vadd.f32 %v295, %v296
        %298 = vst [vmem:[%s221] sm:$0x1] %v297
        %s299 = sand.u32 %s100, 1
        %s300 = scalar_lea.sflag [#allocation4], %s299
        %s301 = sand.u32 %s100, 1
        %s302 = scalar_lea.vmem [#allocation7], %s301
        // Predicated region
        $region37: #{tpu_custom_call.1} parent=27 // pred_check
          %p303 = pneg %p110
        $region38: #{tpu_custom_call.1} parent=27 // pred_check_branch
          %305 = sbr.rel (%p303) target = $region40
        $region39: #{tpu_custom_call.1} parent=27 // pred_region
          %307 = vsyncadd %s300, 0
          %s308 = sadd.s32 %s27, %s26
          %s309 = scalar_lea.hbm %s2, %s308
          %s311 = sshll.u32 %s302, 4
          %s312 = int_to_ptr.vmem [resolvable:$true] %s311
          %s313 = sshll.u32 %s309, 4
          %s314 = int_to_ptr.hbm [resolvable:$true] %s313
          %316 = dma.vmem_to_hbm [thread:$0]  %s312, 16, %s314, %s300
        $region40: #{tpu_custom_call.1} parent=27 // pred_fallthru
          _
      $region28: #{tpu_custom_call.1} parent=5 // pred_fallthru
        _
      %p317 = scmp.le.s32.totalorder 2, %s17
      // Predicated region
      $region41: #{tpu_custom_call.1} parent=5 // pred_check
        %p318 = pneg %p317
      $region42: #{tpu_custom_call.1} parent=5 // pred_check_branch
        %320 = sbr.rel (%p318) target = $region44
      $region43: #{tpu_custom_call.1} parent=5 // pred_region
        %s321 = ssub.s32 %s17, 2
        // Predicated region
        $region45: #{tpu_custom_call.1} parent=43 // pred_check
          %p322 = pneg %p116
        $region46: #{tpu_custom_call.1} parent=43 // pred_check_branch
          %324 = sbr.rel (%p322) target = $region48
        $region47: #{tpu_custom_call.1} parent=43 // pred_region
          %s325 = sand.u32 %s101, 1
          %s326 = scalar_lea.sflag [#allocation4], %s325
          %s327 = sand.u32 %s101, 1
          %s328 = scalar_lea.vmem [#allocation7], %s327
          %330 = dma.done %s326, 16
        $region48: #{tpu_custom_call.1} parent=43 // pred_fallthru
          _
      $region44: #{tpu_custom_call.1} parent=5 // pred_fallthru
        _
    $region6: #{tpu_custom_call.1} parent=1 // loop_footer
      %s21 = sadd.s32 1, %s17
    $region7: #{tpu_custom_call.1} parent=1 // loop_footer_branch
      %16 = sbr.rel target = $region3
    $region8: #{tpu_custom_call.1} parent=1 // loop_exit
      _
    %331 = vsyncpa [#allocation3], 1
    %s332 = scalar_lea.sflag [#allocation3], 1
    %333 = vsyncpa %s332, 1
    %334 = vsyncpa [#allocation6], 1
    %s335 = scalar_lea.sflag [#allocation6], 1
    %336 = vsyncpa %s335, 1
    %337 = vsyncpa [#allocation4], 1
    %s338 = scalar_lea.sflag [#allocation4], 1
    %339 = vsyncpa %s338, 1

</llo_original>
